<compile_context>
chip_gen: v7x
topology: tpu7x:2x2x1
jax: 0.10.0
libtpu: 0.0.40
codegen_flags: <defaults>
</compile_context>

<pallas_src>
import functools
import math

import jax
import jax.numpy as jnp
from jax.experimental import pallas as pl
from jax.experimental.pallas import tpu as pltpu


def _sigmoid(v):
    # Explicit form; exp lowers to the EUP slot.
    return 1.0 / (1.0 + jnp.exp(-v))


# ---------------------------------------------------------------------------
# Kernel 1: GRU cell + EqualLinear affine + per-batch modulated conv weights.
# All operands are tiny (batch x hidden), so a single grid point with whole
# arrays in VMEM is the right shape for this part.
# ---------------------------------------------------------------------------
def _style_gru_kernel(h1_ref, w2_ref, wih_ref, whh_ref, bg_ref,
                      affw_ref, affb_ref, convw_ref,
                      h2_ref, style_ref, wmod_ref, *, conv_scale, hidden):
    h1 = h1_ref[...]          # (N, H)
    xw = w2_ref[...]          # (N, D)

    # Two fused dots instead of six: wih_ref is (D, 3H), whh_ref is (H, 3H),
    # PyTorch GRUCell gate order [r, z, n] along the 3H axis.
    gi = jnp.dot(xw, wih_ref[...], preferred_element_type=jnp.float32)   # (N, 3H)
    gh = jnp.dot(h1, whh_ref[...], preferred_element_type=jnp.float32)   # (N, 3H)
    i_r, i_z, i_n = gi[:, :hidden], gi[:, hidden:2 * hidden], gi[:, 2 * hidden:]
    h_r, h_z, h_n = gh[:, :hidden], gh[:, hidden:2 * hidden], gh[:, 2 * hidden:]

    # bg_ref rows: [b_ir + b_hr, b_iz + b_hz, b_in, b_hn], each (1, H)
    r = _sigmoid(i_r + h_r + bg_ref[0])
    z = _sigmoid(i_z + h_z + bg_ref[1])
    ngate = jnp.tanh(i_n + bg_ref[2] + r * (h_n + bg_ref[3]))
    h2 = (1.0 - z) * ngate + z * h1
    h2_ref[...] = h2

    # EqualLinear affine (weights pre-scaled by 1/sqrt(H) host-side).
    style = jnp.dot(h2, affw_ref[...], preferred_element_type=jnp.float32) + affb_ref[...]
    style_ref[...] = style

    # Per-batch modulated 1x1 conv weight: (N, O, C) = scale * W[o,c] * style[n,c]
    wmod_ref[...] = (conv_scale * convw_ref[...])[None, :, :] * style[:, None, :]


def _style_and_weights(h1, w2, gru_w_ih, gru_w_hh, gru_b_ih, gru_b_hh,
                       aff_w, aff_b, conv_w, aff_scale, conv_scale):
    n, hid = h1.shape
    c = aff_w.shape[0]
    o = conv_w.shape[0]

    # Host-side, O(param-size) re-layout so the kernel only does
    # right-multiplies and 2-D broadcasts (no in-kernel transposes of params).
    wih_t = gru_w_ih.T.astype(jnp.float32)                            # (D, 3H)
    whh_t = gru_w_hh.T.astype(jnp.float32)                            # (H, 3H)
    b_ir, b_iz, b_in = jnp.split(gru_b_ih, 3)
    b_hr, b_hz, b_hn = jnp.split(gru_b_hh, 3)
    b_gates = jnp.stack([b_ir + b_hr, b_iz + b_hz, b_in, b_hn])[:, None, :]  # (4,1,H)
    b_gates = b_gates.astype(jnp.float32)
    aff_wt = (aff_w * aff_scale).T.astype(jnp.float32)                # (H, C)
    aff_b2 = aff_b.reshape(1, c).astype(jnp.float32)                  # lr_mul = 1

    kernel = functools.partial(_style_gru_kernel, conv_scale=conv_scale, hidden=hid)
    h2, style, w_mod = pl.pallas_call(
        kernel,
        out_shape=(
            jax.ShapeDtypeStruct((n, hid), jnp.float32),
            jax.ShapeDtypeStruct((n, c), jnp.float32),
            jax.ShapeDtypeStruct((n, o, c), jnp.float32),
        ),
    )(h1, w2, wih_t, whh_t, b_gates, aff_wt, aff_b2, conv_w)
    return h2, style, w_mod


# ---------------------------------------------------------------------------
# Kernel 2: modulated 1x1 conv (per-batch (O, C) weight) + fused bias add.
# Runs in the activation's native dtype; MXU accumulates in f32.
# ---------------------------------------------------------------------------
def _modconv_kernel(x_ref, w_ref, b_ref, o_ref):
    # x_ref: (C, hw_tile), w_ref: (O, C) f32, b_ref: (O, 1) f32 -> out (O, hw_tile)
    w = w_ref[...].astype(x_ref.dtype)                 # tiny cast, keeps x native
    out = jnp.dot(w, x_ref[...], preferred_element_type=jnp.float32)
    o_ref[...] = (out + b_ref[...]).astype(o_ref.dtype)


def _tile_tuning():
    """(x_tile_target_bytes, double_buffered_budget_bytes, vmem_limit_bytes)."""
    try:
        kind = jax.devices()[0].device_kind.lower()
    except Exception:  # pragma: no cover - defensive
        kind = ""
    if "v5 lite" in kind or "v5lite" in kind or "v5e" in kind:
        # v5e: the explicit raise above the 16 MiB scoped default is what makes
        # ~4 MiB double-buffered blocks legal; larger tiles buy nothing there.
        return 4 * 2**20, 24 * 2**20, 32 * 2**20
    # v6e / v7x (and default): larger tiles amortize the ~0.35 us per-step
    # overhead; 48 MiB scoped limit stays under v7x's 64 MiB physical VMEM.
    return 8 * 2**20, 36 * 2**20, 48 * 2**20


def _plan_spatial(hw, c_in, c_out, esize, x_target_bytes, db_budget_bytes):
    """Pick (hw_tile, hw_padded).

    Either a single full-extent block (exempt from the 128-divisibility rule)
    when the whole feature map fits the tile budget, or a 128-multiple tile
    with HW zero-padded up to a multiple of that tile (never a whole-image
    block that would blow past VMEM on large non-aligned images)."""
    cap_elems = min(x_target_bytes // max(1, c_in * esize),
                    db_budget_bytes // max(1, 2 * (c_in + c_out) * esize))
    cap_elems = max(int(cap_elems), 128)
    if hw <= cap_elems:
        return hw, hw
    tile = max((cap_elems // 128) * 128, 128)
    hw_padded = ((hw + tile - 1) // tile) * tile
    return tile, hw_padded


def _modulated_conv1x1(x_flat, w_mod, bias_col, hw_tile, *, vmem_limit_bytes):
    n, c, hw = x_flat.shape
    o = w_mod.shape[1]
    n_hw = hw // hw_tile
    esize = jnp.dtype(x_flat.dtype).itemsize

    grid_spec = pltpu.PrefetchScalarGridSpec(
        num_scalar_prefetch=0,
        grid=(n, n_hw),                       # two parallel axes -> v7x megacore
        in_specs=[
            pl.BlockSpec((pl.Squeezed(), c, hw_tile), lambda b, s: (b, 0, s)),
            pl.BlockSpec((pl.Squeezed(), o, c), lambda b, s: (b, 0, 0)),
            pl.BlockSpec((o, 1), lambda b, s: (0, 0)),
        ],
        out_specs=pl.BlockSpec((pl.Squeezed(), o, hw_tile), lambda b, s: (b, 0, s)),
    )
    cost = pl.CostEstimate(
        flops=2 * n * o * c * hw + n * o * hw,
        transcendentals=0,
        bytes_accessed=esize * (n * c * hw + n * o * hw) + 4 * (n * o * c + o),
    )
    return pl.pallas_call(
        _modconv_kernel,
        out_shape=jax.ShapeDtypeStruct((n, o, hw), x_flat.dtype),
        grid_spec=grid_spec,
        compiler_params=pltpu.CompilerParams(
            dimension_semantics=("parallel", "parallel"),
            vmem_limit_bytes=vmem_limit_bytes,
        ),
        cost_estimate=cost,
    )(x_flat, w_mod, bias_col)


# ---------------------------------------------------------------------------
# ToRGB forward wrapper.
# ---------------------------------------------------------------------------
def to_rgb_forward(params, h1, x, current_w_style, skip=None):
    """ToRGB.forward. Returns (h2, out_rgb, current_transformed_style)."""
    if skip is not None:
        # TODO(synk): skip path requires Upsample (upfirdn2d blur); not implemented.
        raise NotImplementedError("skip/Upsample path not implemented")

    n, c, hgt, wdt = x.shape
    hw = hgt * wdt
    o = params["conv_w"].shape[1]
    hid = params["gru_w_hh"].shape[1]

    aff_scale = 1.0 / math.sqrt(hid)            # EqualLinear scale (lr_mul = 1)
    conv_scale = 1.0 / math.sqrt(c * 1 * 1)     # GRUModulatedConv2d scale (ks = 1)

    conv_w2 = params["conv_w"].reshape(o, c).astype(jnp.float32)
    h2, style, w_mod = _style_and_weights(
        h1.astype(jnp.float32), current_w_style.astype(jnp.float32),
        params["gru_w_ih"], params["gru_w_hh"],
        params["gru_b_ih"], params["gru_b_hh"],
        params["aff_w"], params["aff_b"], conv_w2,
        aff_scale, conv_scale)

    # Native-dtype activations (no forced f32 upcast / downcast round trips).
    x_flat = x.reshape(n, c, hw)
    bias_col = params["rgb_bias"].reshape(o, 1).astype(jnp.float32)

    # Batch packing for tiny channel counts: p batch elements per grid step via
    # a host-built block-diagonal (pO, pC) weight (slot-bound regime; skip when
    # C is large and the conv is HBM-bound).
    pack = 1
    if c <= 8 and o <= 8:
        for cand in (4, 2):
            if n % cand == 0 and cand * c <= 16 and cand * o <= 16:
                pack = cand
                break
    if pack > 1:
        g = n // pack
        x_pk = x_flat.reshape(g, pack * c, hw)                       # free NCHW view
        eye = jnp.eye(pack, dtype=w_mod.dtype)
        w_pk = jnp.einsum("gpoc,pq->gpoqc",
                          w_mod.reshape(g, pack, o, c), eye).reshape(g, pack * o, pack * c)
        b_pk = jnp.tile(bias_col, (pack, 1))
        n_eff, c_eff, o_eff = g, pack * c, pack * o
    else:
        x_pk, w_pk, b_pk = x_flat, w_mod, bias_col
        n_eff, c_eff, o_eff = n, c, o

    x_target, db_budget, vmem_limit = _tile_tuning()
    esize = jnp.dtype(x_pk.dtype).itemsize
    hw_tile, hw_pad = _plan_spatial(hw, c_eff, o_eff, esize, x_target, db_budget)
    if hw_pad != hw:
        x_pk = jnp.pad(x_pk, ((0, 0), (0, 0), (0, hw_pad - hw)))

    out_flat = _modulated_conv1x1(x_pk, w_pk, b_pk, hw_tile,
                                  vmem_limit_bytes=vmem_limit)
    if hw_pad != hw:
        out_flat = out_flat[:, :, :hw]
    if pack > 1:
        out_flat = out_flat.reshape(n, o, hw)
    out = out_flat.reshape(n, o, hgt, wdt)
    return h2, out, style


# ---------------------------------------------------------------------------
# Pure-JAX reference matching the PyTorch module exactly.
# ---------------------------------------------------------------------------
def _reference_to_rgb(params, h1, x, current_w_style):
    n, c, hgt, wdt = x.shape
    o = params["conv_w"].shape[1]
    hid = params["gru_w_hh"].shape[1]

    gi = current_w_style @ params["gru_w_ih"].T + params["gru_b_ih"]
    gh = h1 @ params["gru_w_hh"].T + params["gru_b_hh"]
    i_r, i_z, i_n = jnp.split(gi, 3, axis=1)
    h_r, h_z, h_n = jnp.split(gh, 3, axis=1)
    r = jax.nn.sigmoid(i_r + h_r)
    z = jax.nn.sigmoid(i_z + h_z)
    ngate = jnp.tanh(i_n + r * h_n)
    h2 = (1.0 - z) * ngate + z * h1

    style = h2 @ (params["aff_w"] / math.sqrt(hid)).T + params["aff_b"]

    w = params["conv_w"].reshape(o, c)
    w_mod = (1.0 / math.sqrt(c)) * w[None, :, :] * style[:, None, :]   # (n, o, c)
    out = jnp.einsum("noc,nchw->nohw", w_mod, x) + params["rgb_bias"].reshape(1, o, 1, 1)
    return h2, out, style


# ---------------------------------------------------------------------------
# Test harness.
# ---------------------------------------------------------------------------
def _make_params(key, c_in, hidden, w_dim, o):
    ks = jax.random.split(key, 7)
    bound = 1.0 / math.sqrt(hidden)
    return {
        "gru_w_ih": jax.random.uniform(ks[0], (3 * hidden, w_dim), jnp.float32, -bound, bound),
        "gru_w_hh": jax.random.uniform(ks[1], (3 * hidden, hidden), jnp.float32, -bound, bound),
        "gru_b_ih": jax.random.uniform(ks[2], (3 * hidden,), jnp.float32, -bound, bound),
        "gru_b_hh": jax.random.uniform(ks[3], (3 * hidden,), jnp.float32, -bound, bound),
        "aff_w": jax.random.normal(ks[4], (c_in, hidden), jnp.float32),
        "aff_b": jnp.zeros((c_in,), jnp.float32),
        "conv_w": jax.random.normal(ks[5], (1, o, c_in, 1, 1), jnp.float32),
        "rgb_bias": 0.1 * jax.random.normal(ks[6], (1, o, 1, 1), jnp.float32),
    }


def _check(key, n, c_in, hgt, wdt, hidden, w_dim, o):
    ks = jax.random.split(key, 4)
    x = jax.random.normal(ks[0], (n, c_in, hgt, wdt), jnp.float32)
    h1 = jax.random.normal(ks[1], (n, hidden), jnp.float32)
    w_style = jax.random.normal(ks[2], (n, w_dim), jnp.float32)
    params = _make_params(ks[3], c_in, hidden, w_dim, o)

    h2, out, style = to_rgb_forward(params, h1, x, w_style)
    h2, out, style = jax.block_until_ready((h2, out, style))

    h2_ref, out_ref, style_ref = _reference_to_rgb(params, h1, x, w_style)
    assert h2.shape == h2_ref.shape and out.shape == out_ref.shape and style.shape == style_ref.shape
    assert jnp.allclose(h2, h2_ref, atol=1e-4, rtol=1e-4), "h2 mismatch vs reference"
    assert jnp.allclose(style, style_ref, atol=1e-4, rtol=1e-4), "style mismatch vs reference"
    assert jnp.allclose(out, out_ref, atol=1e-4, rtol=1e-4), "rgb output mismatch vs reference"


if __name__ == "__main__":
    key = jax.random.PRNGKey(0)
    k1, k2 = jax.random.split(key)
    # Small C/O: exercises the batch-packed (block-diagonal) path.
    _check(k1, n=2, c_in=4, hgt=16, wdt=16, hidden=32, w_dim=32, o=3)
    # Larger C: exercises the plain per-batch path.
    _check(k2, n=2, c_in=32, hgt=16, wdt=16, hidden=32, w_dim=32, o=3)
    print("KERNEL_OK")
</pallas_src>

<mosaic_0001>
module attributes {stable_mosaic.version = 11 : i64} {
  func.func @_style_gru_kernel(%arg0: memref<2x32xf32, #tpu.memory_space<vmem>>, %arg1: memref<2x32xf32, #tpu.memory_space<vmem>>, %arg2: memref<32x96xf32, #tpu.memory_space<vmem>>, %arg3: memref<32x96xf32, #tpu.memory_space<vmem>>, %arg4: memref<4x1x32xf32, #tpu.memory_space<vmem>>, %arg5: memref<32x4xf32, #tpu.memory_space<vmem>>, %arg6: memref<1x4xf32, #tpu.memory_space<vmem>>, %arg7: memref<3x4xf32, #tpu.memory_space<vmem>>, %arg8: memref<2x32xf32, #tpu.memory_space<vmem>>, %arg9: memref<2x4xf32, #tpu.memory_space<vmem>>, %arg10: memref<2x3x4xf32, #tpu.memory_space<vmem>>) attributes {dimension_semantics = [], scalar_prefetch = 0 : i64, scratch_operands = 0 : i64, tpu.core_type = #tpu.core_type<tc>} {
    %c0 = arith.constant 0 : index
    %c0_0 = arith.constant 0 : index
    %0 = vector.load %arg0[%c0, %c0_0] : memref<2x32xf32, #tpu.memory_space<vmem>>, vector<2x32xf32>
    %c0_1 = arith.constant 0 : index
    %c0_2 = arith.constant 0 : index
    %1 = vector.load %arg1[%c0_1, %c0_2] : memref<2x32xf32, #tpu.memory_space<vmem>>, vector<2x32xf32>
    %c0_3 = arith.constant 0 : index
    %c0_4 = arith.constant 0 : index
    %2 = vector.load %arg2[%c0_3, %c0_4] : memref<32x96xf32, #tpu.memory_space<vmem>>, vector<32x96xf32>
    %cst = arith.constant dense<0.000000e+00> : vector<2x96xf32>
    %3 = tpu.matmul %1, %2, %cst {dimension_numbers = #tpu.dot_dimension_numbers<[1], [0], [0], [1], [0, 0, 1, 1], [], []>} : vector<2x32xf32>, vector<32x96xf32>, vector<2x96xf32> -> vector<2x96xf32>
    %c0_5 = arith.constant 0 : index
    %c0_6 = arith.constant 0 : index
    %4 = vector.load %arg3[%c0_5, %c0_6] : memref<32x96xf32, #tpu.memory_space<vmem>>, vector<32x96xf32>
    %cst_7 = arith.constant dense<0.000000e+00> : vector<2x96xf32>
    %5 = tpu.matmul %0, %4, %cst_7 {dimension_numbers = #tpu.dot_dimension_numbers<[1], [0], [0], [1], [0, 0, 1, 1], [], []>} : vector<2x32xf32>, vector<32x96xf32>, vector<2x96xf32> -> vector<2x96xf32>
    %6 = vector.extract_strided_slice %3 {offsets = [0, 0], sizes = [2, 32], strides = [1, 1]} : vector<2x96xf32> to vector<2x32xf32>
    %7 = vector.extract_strided_slice %3 {offsets = [0, 32], sizes = [2, 32], strides = [1, 1]} : vector<2x96xf32> to vector<2x32xf32>
    %8 = vector.extract_strided_slice %3 {offsets = [0, 64], sizes = [2, 32], strides = [1, 1]} : vector<2x96xf32> to vector<2x32xf32>
    %9 = vector.extract_strided_slice %5 {offsets = [0, 0], sizes = [2, 32], strides = [1, 1]} : vector<2x96xf32> to vector<2x32xf32>
    %10 = vector.extract_strided_slice %5 {offsets = [0, 32], sizes = [2, 32], strides = [1, 1]} : vector<2x96xf32> to vector<2x32xf32>
    %11 = vector.extract_strided_slice %5 {offsets = [0, 64], sizes = [2, 32], strides = [1, 1]} : vector<2x96xf32> to vector<2x32xf32>
    %12 = arith.addf %6, %9 : vector<2x32xf32>
    %c0_8 = arith.constant 0 : index
    %c0_9 = arith.constant 0 : index
    %c0_10 = arith.constant 0 : index
    %13 = vector.load %arg4[%c0_8, %c0_9, %c0_10] : memref<4x1x32xf32, #tpu.memory_space<vmem>>, vector<1x1x32xf32>
    %14 = vector.shape_cast %13 : vector<1x1x32xf32> to vector<1x32xf32>
    %15 = vector.broadcast %14 : vector<1x32xf32> to vector<2x32xf32>
    %16 = arith.addf %12, %15 : vector<2x32xf32>
    %cst_11 = arith.constant 0.000000e+00 : f32
    %17 = vector.broadcast %cst_11 : f32 to vector<2x32xf32>
    %18 = arith.subf %17, %16 : vector<2x32xf32>
    %19 = math.exp %18 : vector<2x32xf32>
    %cst_12 = arith.constant 1.000000e+00 : f32
    %20 = vector.broadcast %cst_12 : f32 to vector<2x32xf32>
    %21 = arith.addf %20, %19 : vector<2x32xf32>
    %cst_13 = arith.constant 1.000000e+00 : f32
    %22 = vector.broadcast %cst_13 : f32 to vector<2x32xf32>
    %23 = arith.divf %22, %21 : vector<2x32xf32>
    %24 = arith.addf %7, %10 : vector<2x32xf32>
    %c1 = arith.constant 1 : index
    %c0_14 = arith.constant 0 : index
    %c0_15 = arith.constant 0 : index
    %25 = vector.load %arg4[%c1, %c0_14, %c0_15] : memref<4x1x32xf32, #tpu.memory_space<vmem>>, vector<1x1x32xf32>
    %26 = vector.shape_cast %25 : vector<1x1x32xf32> to vector<1x32xf32>
    %27 = vector.broadcast %26 : vector<1x32xf32> to vector<2x32xf32>
    %28 = arith.addf %24, %27 : vector<2x32xf32>
    %cst_16 = arith.constant 0.000000e+00 : f32
    %29 = vector.broadcast %cst_16 : f32 to vector<2x32xf32>
    %30 = arith.subf %29, %28 : vector<2x32xf32>
    %31 = math.exp %30 : vector<2x32xf32>
    %cst_17 = arith.constant 1.000000e+00 : f32
    %32 = vector.broadcast %cst_17 : f32 to vector<2x32xf32>
    %33 = arith.addf %32, %31 : vector<2x32xf32>
    %cst_18 = arith.constant 1.000000e+00 : f32
    %34 = vector.broadcast %cst_18 : f32 to vector<2x32xf32>
    %35 = arith.divf %34, %33 : vector<2x32xf32>
    %c2 = arith.constant 2 : index
    %c0_19 = arith.constant 0 : index
    %c0_20 = arith.constant 0 : index
    %36 = vector.load %arg4[%c2, %c0_19, %c0_20] : memref<4x1x32xf32, #tpu.memory_space<vmem>>, vector<1x1x32xf32>
    %37 = vector.shape_cast %36 : vector<1x1x32xf32> to vector<1x32xf32>
    %38 = vector.broadcast %37 : vector<1x32xf32> to vector<2x32xf32>
    %39 = arith.addf %8, %38 : vector<2x32xf32>
    %c3 = arith.constant 3 : index
    %c0_21 = arith.constant 0 : index
    %c0_22 = arith.constant 0 : index
    %40 = vector.load %arg4[%c3, %c0_21, %c0_22] : memref<4x1x32xf32, #tpu.memory_space<vmem>>, vector<1x1x32xf32>
    %41 = vector.shape_cast %40 : vector<1x1x32xf32> to vector<1x32xf32>
    %42 = vector.broadcast %41 : vector<1x32xf32> to vector<2x32xf32>
    %43 = arith.addf %11, %42 : vector<2x32xf32>
    %44 = arith.mulf %23, %43 : vector<2x32xf32>
    %45 = arith.addf %39, %44 : vector<2x32xf32>
    %46 = math.tanh %45 : vector<2x32xf32>
    %cst_23 = arith.constant 1.000000e+00 : f32
    %47 = vector.broadcast %cst_23 : f32 to vector<2x32xf32>
    %48 = arith.subf %47, %35 : vector<2x32xf32>
    %49 = arith.mulf %48, %46 : vector<2x32xf32>
    %50 = arith.mulf %35, %0 : vector<2x32xf32>
    %51 = arith.addf %49, %50 : vector<2x32xf32>
    %c0_24 = arith.constant 0 : index
    %c0_25 = arith.constant 0 : index
    %52 = vector.load %arg8[%c0_24, %c0_25] : memref<2x32xf32, #tpu.memory_space<vmem>>, vector<2x32xf32>
    tpu.vector_store %arg8[%c0_24, %c0_25], %51 {strides = array<i32>} : memref<2x32xf32, #tpu.memory_space<vmem>>, vector<2x32xf32>,
    %c0_26 = arith.constant 0 : index
    %c0_27 = arith.constant 0 : index
    %53 = vector.load %arg5[%c0_26, %c0_27] : memref<32x4xf32, #tpu.memory_space<vmem>>, vector<32x4xf32>
    %cst_28 = arith.constant dense<0.000000e+00> : vector<2x4xf32>
    %54 = tpu.matmul %51, %53, %cst_28 {dimension_numbers = #tpu.dot_dimension_numbers<[1], [0], [0], [1], [0, 0, 1, 1], [], []>} : vector<2x32xf32>, vector<32x4xf32>, vector<2x4xf32> -> vector<2x4xf32>
    %c0_29 = arith.constant 0 : index
    %c0_30 = arith.constant 0 : index
    %55 = vector.load %arg6[%c0_29, %c0_30] : memref<1x4xf32, #tpu.memory_space<vmem>>, vector<1x4xf32>
    %56 = vector.broadcast %55 : vector<1x4xf32> to vector<2x4xf32>
    %57 = arith.addf %54, %56 : vector<2x4xf32>
    %c0_31 = arith.constant 0 : index
    %c0_32 = arith.constant 0 : index
    %58 = vector.load %arg9[%c0_31, %c0_32] : memref<2x4xf32, #tpu.memory_space<vmem>>, vector<2x4xf32>
    tpu.vector_store %arg9[%c0_31, %c0_32], %57 {strides = array<i32>} : memref<2x4xf32, #tpu.memory_space<vmem>>, vector<2x4xf32>,
    %c0_33 = arith.constant 0 : index
    %c0_34 = arith.constant 0 : index
    %59 = vector.load %arg7[%c0_33, %c0_34] : memref<3x4xf32, #tpu.memory_space<vmem>>, vector<3x4xf32>
    %cst_35 = arith.constant 5.000000e-01 : f32
    %60 = vector.broadcast %cst_35 : f32 to vector<3x4xf32>
    %61 = arith.mulf %60, %59 : vector<3x4xf32>
    %62 = vector.shape_cast %61 : vector<3x4xf32> to vector<1x3x4xf32>
    %63 = vector.shape_cast %57 : vector<2x4xf32> to vector<2x1x4xf32>
    %64 = vector.broadcast %62 : vector<1x3x4xf32> to vector<2x3x4xf32>
    %65 = vector.broadcast %63 : vector<2x1x4xf32> to vector<2x3x4xf32>
    %66 = arith.mulf %64, %65 : vector<2x3x4xf32>
    %c0_36 = arith.constant 0 : index
    %c0_37 = arith.constant 0 : index
    %c0_38 = arith.constant 0 : index
    %67 = vector.load %arg10[%c0_36, %c0_37, %c0_38] : memref<2x3x4xf32, #tpu.memory_space<vmem>>, vector<2x3x4xf32>
    tpu.vector_store %arg10[%c0_36, %c0_37, %c0_38], %66 {strides = array<i32>} : memref<2x3x4xf32, #tpu.memory_space<vmem>>, vector<2x3x4xf32>,
    return
  }
}

</mosaic_0001>

<llo_original>
// kernel: tpu_custom_call.1
$region0: #{tpu_custom_call.1}
  #allocation0 [shape = 'u32[]', space=smem, size = 0x4, offset = 0x4, fixed_abs, tag = 'smem constant byte address 0x4 - core index']
  #allocation1 [shape = 'u32[144,128]{1,0:T(1,128)}', space=vmem, size = 0x12000, scoped, tag = 'internal scratch']
  %s0 = inlined_call_operand.vmem [shape: f32[2,32], index: 0, kind: input, shape index: {}]
  %s1 = inlined_call_operand.hbm [shape: f32[2,32], index: 1, kind: input, shape index: {}]
  %s2 = inlined_call_operand.vmem [shape: f32[32,96], index: 2, kind: input, shape index: {}]
  %s3 = inlined_call_operand.hbm [shape: f32[32,96], index: 3, kind: input, shape index: {}]
  %s4 = inlined_call_operand.vmem [shape: f32[4,1,32], index: 4, kind: input, shape index: {}]
  %s5 = inlined_call_operand.vmem [shape: f32[32,4], index: 5, kind: input, shape index: {}]
  %s6 = inlined_call_operand.vmem [shape: f32[1,4], index: 6, kind: input, shape index: {}]
  %s7 = inlined_call_operand.vmem [shape: f32[3,4], index: 7, kind: input, shape index: {}]
  %s8 = inlined_call_operand.hbm [shape: f32[2,32], index: 8, kind: output, shape index: {0}]
  %s9 = inlined_call_operand.hbm [shape: f32[2,4], index: 9, kind: output, shape index: {1}]
  %s10 = inlined_call_operand.vmem [shape: f32[2,3,4], index: 10, kind: output, shape index: {2}]
  %11 = xla_tuple %s8, %s9, %s10
  %s12 = sld [smem:[#allocation0]]
  $region66: #{tpu_custom_call.1} parent=0
    _
  %s14 = ssub.s32 1, %s12
  %s15 = scalar_select 0, %s14, %s12
  $region1: #{tpu_custom_call.1} parent=0
    #allocation2 [shape = 'u8[1024]{0}', space=vmem, size = 0x400, scoped, tag = 'input window, operand 1, single buffered']
    #allocation3 [shape = 's32[1]{0}', space=sflag, size = 0x4, scoped, tag = 'scoped memory for tpu_custom_call.1']
    #allocation4 [shape = 's32[1]{0}', space=sflag, size = 0x4, scoped, tag = 'scoped memory for tpu_custom_call.1']
    #allocation5 [shape = 'u8[16384]{0}', space=vmem, size = 0x4000, scoped, tag = 'input window, operand 3, single buffered']
    #allocation6 [shape = 's32[1]{0}', space=sflag, size = 0x4, scoped, tag = 'scoped memory for tpu_custom_call.1']
    #allocation7 [shape = 'u8[1024]{0}', space=vmem, size = 0x400, scoped, tag = 'output window, operand 0, single buffered']
    #allocation8 [shape = 'u8[1024]{0}', space=vmem, size = 0x400, scoped, tag = 'output window, operand 1, single buffered']
    #allocation9 [shape = 's32[1]{0}', space=sflag, size = 0x4, scoped, tag = 'scoped memory for tpu_custom_call.1']
    %16 = vsyncpa [#allocation3], 0
    %17 = vsyncpa [#allocation6], 0
    %18 = vsyncpa [#allocation4], 0
    %19 = vsyncpa [#allocation9], 0
    // Predicated region
    $region2: #{tpu_custom_call.1} parent=1 // pred_check
      _
    $region3: #{tpu_custom_call.1} parent=1 // pred_check_branch
      %21 = sbr.rel (0) target = $region5
    $region4: #{tpu_custom_call.1} parent=1 // pred_region
      _
    $region5: #{tpu_custom_call.1} parent=1 // pred_fallthru
      _
    // Predicated region
    $region6: #{tpu_custom_call.1} parent=1 // pred_check
      _
    $region7: #{tpu_custom_call.1} parent=1 // pred_check_branch
      %23 = sbr.rel (0) target = $region9
    $region8: #{tpu_custom_call.1} parent=1 // pred_region
      %s25 = ssub.s32 32, 32
      %26 = vsyncadd [#allocation3], %s25
      %s28 = sshll.u32 [#allocation2], 4
      %s29 = int_to_ptr.vmem [resolvable:$true] %s28
      %31 = dma.hbm_to_vmem [thread:$0]  %s1, 32, %s29, [#allocation3]
    $region9: #{tpu_custom_call.1} parent=1 // pred_fallthru
      _
    // Predicated region
    $region10: #{tpu_custom_call.1} parent=1 // pred_check
      _
    $region11: #{tpu_custom_call.1} parent=1 // pred_check_branch
      %33 = sbr.rel (0) target = $region13
    $region12: #{tpu_custom_call.1} parent=1 // pred_region
      _
    $region13: #{tpu_custom_call.1} parent=1 // pred_fallthru
      _
    // Predicated region
    $region14: #{tpu_custom_call.1} parent=1 // pred_check
      _
    $region15: #{tpu_custom_call.1} parent=1 // pred_check_branch
      %35 = sbr.rel (0) target = $region17
    $region16: #{tpu_custom_call.1} parent=1 // pred_region
      %s37 = ssub.s32 512, 512
      %38 = vsyncadd [#allocation6], %s37
      %s39 = sshll.u32 [#allocation5], 4
      %s40 = int_to_ptr.vmem [resolvable:$true] %s39
      %45 = dma.hbm_to_vmem [thread:$0]  %s3, 512, %s40, [#allocation6], 128, 128, 8
    $region17: #{tpu_custom_call.1} parent=1 // pred_fallthru
      _
    // Predicated region
    $region18: #{tpu_custom_call.1} parent=1 // pred_check
      _
    $region19: #{tpu_custom_call.1} parent=1 // pred_check_branch
      %47 = sbr.rel (0) target = $region21
    $region20: #{tpu_custom_call.1} parent=1 // pred_region
      _
    $region21: #{tpu_custom_call.1} parent=1 // pred_fallthru
      _
    // Predicated region
    $region22: #{tpu_custom_call.1} parent=1 // pred_check
      _
    $region23: #{tpu_custom_call.1} parent=1 // pred_check_branch
      %49 = sbr.rel (0) target = $region25
    $region24: #{tpu_custom_call.1} parent=1 // pred_region
      _
    $region25: #{tpu_custom_call.1} parent=1 // pred_fallthru
      _
    // Predicated region
    $region26: #{tpu_custom_call.1} parent=1 // pred_check
      _
    $region27: #{tpu_custom_call.1} parent=1 // pred_check_branch
      %51 = sbr.rel (0) target = $region29
    $region28: #{tpu_custom_call.1} parent=1 // pred_region
      _
    $region29: #{tpu_custom_call.1} parent=1 // pred_fallthru
      _
    // Predicated region
    $region30: #{tpu_custom_call.1} parent=1 // pred_check
      _
    $region31: #{tpu_custom_call.1} parent=1 // pred_check_branch
      %53 = sbr.rel (0) target = $region33
    $region32: #{tpu_custom_call.1} parent=1 // pred_region
      _
    $region33: #{tpu_custom_call.1} parent=1 // pred_fallthru
      _
    // Predicated region
    $region34: #{tpu_custom_call.1} parent=1 // pred_check
      _
    $region35: #{tpu_custom_call.1} parent=1 // pred_check_branch
      %55 = sbr.rel (0) target = $region37
    $region36: #{tpu_custom_call.1} parent=1 // pred_region
      %56 = dma.done [#allocation3], 32
    $region37: #{tpu_custom_call.1} parent=1 // pred_fallthru
      _
    // Predicated region
    $region38: #{tpu_custom_call.1} parent=1 // pred_check
      _
    $region39: #{tpu_custom_call.1} parent=1 // pred_check_branch
      %58 = sbr.rel (0) target = $region41
    $region40: #{tpu_custom_call.1} parent=1 // pred_region
      %59 = dma.done [#allocation6], 512
    $region41: #{tpu_custom_call.1} parent=1 // pred_fallthru
      _
    %v60 = vld [vmem:[%s0] sm:$0x3]
    %v61 = vld [vmem:[#allocation2] sm:$0x3]
    %v62 = vld [vmem:[%s2] sm:$0xff]
    %v63 = vld [vmem:[%s2 + $0x8] sm:$0xff]
    %v64 = vld [vmem:[%s2 + $0x10] sm:$0xff]
    %v65 = vld [vmem:[%s2 + $0x18] sm:$0xff]
    %vm66 = vcmask 261120
    %v68 = vsel %vm66, %v61, 0
    %70 = vmatprep.subr.mxu0 0.0
    %71 = vmatpush1.msra.mxu0 %v62
    %72 = vmatprep.subr.mxu0 0.0
    %73 = vmatpush1.msra.mxu0 %v63
    %74 = vmatprep.subr.mxu0 0.0
    %75 = vmatpush1.msra.mxu0 %v64
    %76 = vmatprep.subr.mxu0 0.0
    %77 = vmatpush1.msra.mxu0 %v65
    %78 = vmatprep.subr.mxu0 0.0
    %79 = vmatpush1.msra.mxu0 0.0
    %80 = vmatprep.subr.mxu0 0.0
    %81 = vmatpush1.msra.mxu0 0.0
    %82 = vmatprep.subr.mxu0 0.0
    %83 = vmatpush1.msra.mxu0 0.0
    %84 = vmatprep.subr.mxu0 0.0
    %85 = vmatpush1.msra.mxu0 0.0
    %86 = vmatprep.subr.mxu0 0.0
    %87 = vmatpush1.msra.mxu0 0.0
    %88 = vmatprep.subr.mxu0 0.0
    %89 = vmatpush1.msra.mxu0 0.0
    %90 = vmatprep.subr.mxu0 0.0
    %91 = vmatpush1.msra.mxu0 0.0
    %92 = vmatprep.subr.mxu0 0.0
    %93 = vmatpush1.msra.mxu0 0.0
    %94 = vmatprep.subr.mxu0 0.0
    %95 = vmatpush1.msra.mxu0 0.0
    %96 = vmatprep.subr.mxu0 0.0
    %97 = vmatpush1.msra.mxu0 0.0
    %98 = vmatprep.subr.mxu0 0.0
    %99 = vmatpush1.msra.mxu0 0.0
    %100 = vmatprep.subr.mxu0 0.0
    %101 = vmatpush1.msra.mxu0 0.0
    %102 = vmatprep.subr.mxu0 0.0
    %103 = vmatpush1.msra.mxu0 0.0
    %104 = vmatprep.subr.mxu0 0.0
    %105 = vmatpush1.msra.mxu0 0.0
    %106 = vmatprep.subr.mxu0 0.0
    %107 = vmatpush1.msra.mxu0 0.0
    %108 = vmatprep.subr.mxu0 0.0
    %109 = vmatpush1.msra.mxu0 0.0
    %110 = vmatprep.subr.mxu0 0.0
    %111 = vmatpush1.msra.mxu0 0.0
    %112 = vmatprep.subr.mxu0 0.0
    %113 = vmatpush1.msra.mxu0 0.0
    %114 = vmatprep.subr.mxu0 0.0
    %115 = vmatpush1.msra.mxu0 0.0
    %116 = vmatprep.subr.mxu0 0.0
    %117 = vmatpush1.msra.mxu0 0.0
    %118 = vmatprep.subr.mxu0 0.0
    %119 = vmatpush1.msra.mxu0 0.0
    %120 = vmatprep.subr.mxu0 0.0
    %121 = vmatpush1.msra.mxu0 0.0
    %122 = vmatprep.subr.mxu0 0.0
    %123 = vmatpush1.msra.mxu0 0.0
    %124 = vmatprep.subr.mxu0 0.0
    %125 = vmatpush1.msra.mxu0 0.0
    %126 = vmatprep.subr.mxu0 0.0
    %127 = vmatpush1.msra.mxu0 0.0
    %128 = vmatprep.subr.mxu0 0.0
    %129 = vmatpush1.msra.mxu0 0.0
    %130 = vmatprep.subr.mxu0 0.0
    %131 = vmatpush1.msra.mxu0 0.0
    %132 = vmatprep.subr.mxu0 0.0
    %133 = vmatpush1.msra.mxu0 0.0
    %134 = vmatprep.mubr.f32.mxu0 0.0
    %135 = vmatmul.mubr.f32.gmra.mrb[0].mxu0 %v68
    %v136 = vpop.f32.mrb[0].mxu0
    %v137 = vadd.f32 0.0, %v136
    %v138 = vpop.f32.mrb[0].mxu0
    %139 = vdwg.mxu0
    %v140 = vld [vmem:[#allocation5] sm:$0xff]
    %v141 = vld [vmem:[#allocation5 + $0x8] sm:$0xff]
    %v142 = vld [vmem:[#allocation5 + $0x10] sm:$0xff]
    %v143 = vld [vmem:[#allocation5 + $0x18] sm:$0xff]
    %v145 = vsel %vm66, %v60, 0
    %147 = vmatprep.subr.mxu0 0.0
    %148 = vmatpush1.msra.mxu0 %v140
    %149 = vmatprep.subr.mxu0 0.0
    %150 = vmatpush1.msra.mxu0 %v141
    %151 = vmatprep.subr.mxu0 0.0
    %152 = vmatpush1.msra.mxu0 %v142
    %153 = vmatprep.subr.mxu0 0.0
    %154 = vmatpush1.msra.mxu0 %v143
    %155 = vmatprep.subr.mxu0 0.0
    %156 = vmatpush1.msra.mxu0 0.0
    %157 = vmatprep.subr.mxu0 0.0
    %158 = vmatpush1.msra.mxu0 0.0
    %159 = vmatprep.subr.mxu0 0.0
    %160 = vmatpush1.msra.mxu0 0.0
    %161 = vmatprep.subr.mxu0 0.0
    %162 = vmatpush1.msra.mxu0 0.0
    %163 = vmatprep.subr.mxu0 0.0
    %164 = vmatpush1.msra.mxu0 0.0
    %165 = vmatprep.subr.mxu0 0.0
    %166 = vmatpush1.msra.mxu0 0.0
    %167 = vmatprep.subr.mxu0 0.0
    %168 = vmatpush1.msra.mxu0 0.0
    %169 = vmatprep.subr.mxu0 0.0
    %170 = vmatpush1.msra.mxu0 0.0
    %171 = vmatprep.subr.mxu0 0.0
    %172 = vmatpush1.msra.mxu0 0.0
    %173 = vmatprep.subr.mxu0 0.0
    %174 = vmatpush1.msra.mxu0 0.0
    %175 = vmatprep.subr.mxu0 0.0
    %176 = vmatpush1.msra.mxu0 0.0
    %177 = vmatprep.subr.mxu0 0.0
    %178 = vmatpush1.msra.mxu0 0.0
    %179 = vmatprep.subr.mxu0 0.0
    %180 = vmatpush1.msra.mxu0 0.0
    %181 = vmatprep.subr.mxu0 0.0
    %182 = vmatpush1.msra.mxu0 0.0
    %183 = vmatprep.subr.mxu0 0.0
    %184 = vmatpush1.msra.mxu0 0.0
    %185 = vmatprep.subr.mxu0 0.0
    %186 = vmatpush1.msra.mxu0 0.0
    %187 = vmatprep.subr.mxu0 0.0
    %188 = vmatpush1.msra.mxu0 0.0
    %189 = vmatprep.subr.mxu0 0.0
    %190 = vmatpush1.msra.mxu0 0.0
    %191 = vmatprep.subr.mxu0 0.0
    %192 = vmatpush1.msra.mxu0 0.0
    %193 = vmatprep.subr.mxu0 0.0
    %194 = vmatpush1.msra.mxu0 0.0
    %195 = vmatprep.subr.mxu0 0.0
    %196 = vmatpush1.msra.mxu0 0.0
    %197 = vmatprep.subr.mxu0 0.0
    %198 = vmatpush1.msra.mxu0 0.0
    %199 = vmatprep.subr.mxu0 0.0
    %200 = vmatpush1.msra.mxu0 0.0
    %201 = vmatprep.subr.mxu0 0.0
    %202 = vmatpush1.msra.mxu0 0.0
    %203 = vmatprep.subr.mxu0 0.0
    %204 = vmatpush1.msra.mxu0 0.0
    %205 = vmatprep.subr.mxu0 0.0
    %206 = vmatpush1.msra.mxu0 0.0
    %207 = vmatprep.subr.mxu0 0.0
    %208 = vmatpush1.msra.mxu0 0.0
    %209 = vmatprep.subr.mxu0 0.0
    %210 = vmatpush1.msra.mxu0 0.0
    %211 = vmatprep.mubr.f32.mxu0 0.0
    %212 = vmatmul.mubr.f32.gmra.mrb[0].mxu0 %v145
    %v213 = vpop.f32.mrb[0].mxu0
    %v214 = vadd.f32 0.0, %v213
    %v215 = vpop.f32.mrb[0].mxu0
    %216 = vdwg.mxu0
    %v217 = vadd.f32 %v137, %v214
    %v218 = vld [vmem:[%s4] sm:$0x1]
    %v220 = vlaneseq
    %v221 = vshrl.u32 %v220, 7
    %v222 = vsub.s32 0, %v221
    %v223 = vrot.slane %v218, %v222
    %v225 = vadd.f32 %v217, %v223
    %v226 = vsub.f32 0.0, %v225
    %v227 = vmul.f32 %v226, 1.442695
    %v228 = vpow.pop %v227
    %v229 = vadd.f32 %v228, 1.0
    %v230 = vrcp.pop %v229
    %v231 = vmul.f32 1.0, %v230
    %s232 = scalar_lea.vmem %s4, 1
    %v233 = vld [vmem:[%s232] sm:$0x1]
    %v235 = vlaneseq
    %v236 = vshrl.u32 %v235, 7
    %v237 = vsub.s32 0, %v236
    %v238 = vrot.slane %v233, %v237
    %239 = vrot.lane.b32.xlu0 %v238, 32
    %v240 = vpop.permute.xlu0 %239
    %v242 = vadd.f32 %v217, %v240
    %v243 = vsub.f32 0.0, %v242
    %v244 = vmul.f32 %v243, 1.442695
    %v245 = vpow.pop %v244
    %v246 = vadd.f32 %v245, 1.0
    %v247 = vrcp.pop %v246
    %v248 = vmul.f32 1.0, %v247
    %s249 = scalar_lea.vmem %s4, 2
    %v250 = vld [vmem:[%s249] sm:$0x1]
    %v252 = vlaneseq
    %v253 = vshrl.u32 %v252, 7
    %v254 = vsub.s32 0, %v253
    %v255 = vrot.slane %v250, %v254
    %256 = vrot.lane.b32.xlu0 %v255, 64
    %v257 = vpop.permute.xlu0 %256
    %v259 = vadd.f32 %v137, %v257
    %s260 = scalar_lea.vmem %s4, 3
    %v261 = vld [vmem:[%s260] sm:$0x1]
    %v263 = vlaneseq
    %v264 = vshrl.u32 %v263, 7
    %v265 = vsub.s32 0, %v264
    %v266 = vrot.slane %v261, %v265
    %267 = vrot.lane.b32.xlu0 %v266, 64
    %v268 = vpop.permute.xlu0 %267
    %v270 = vadd.f32 %v214, %v268
    %272 = vrot.lane.b32.xlu0 %v270, 64
    %v273 = vpop.permute.xlu0 %272
    %v275 = vmul.f32 %v231, %v273
    %277 = vrot.lane.b32.xlu0 %v275, 64
    %v278 = vpop.permute.xlu0 %277
    %v280 = vadd.f32 %v259, %v278
    %v281 = vtanh.pop %v280
    %v282 = vsub.f32 1.0, %v248
    %284 = vrot.lane.b32.xlu0 %v281, 96
    %v285 = vpop.permute.xlu0 %284
    %v287 = vmul.f32 %v282, %v285
    %288 = vrot.lane.b32.xlu0 %v60, 32
    %v289 = vpop.permute.xlu0 %288
    %v291 = vmul.f32 %v248, %v289
    %v292 = vadd.f32 %v287, %v291
    %294 = vrot.lane.b32.xlu0 %v292, 96
    %v295 = vpop.permute.xlu0 %294
    %vm297 = vcmask 254976
    %298 = vst.msk [vmem:[#allocation7] sm:$0x3] %vm297, %v295
    %v299 = vld [vmem:[%s5] sm:$0xff]
    %v300 = vld [vmem:[%s5 + $0x8] sm:$0xff]
    %v301 = vld [vmem:[%s5 + $0x10] sm:$0xff]
    %v302 = vld [vmem:[%s5 + $0x18] sm:$0xff]
    %v303 = vld [vmem:[%s6] sm:$0x1]
    %v305 = vlaneseq
    %v306 = vshrl.u32 %v305, 7
    %v307 = vsub.s32 0, %v306
    %v308 = vrot.slane %v303, %v307
    %v310 = vsel %vm66, %v295, 0
    %312 = vmatprep.subr.mxu0 0.0
    %313 = vmatpush1.msra.mxu0 %v299
    %314 = vmatprep.subr.mxu0 0.0
    %315 = vmatpush1.msra.mxu0 %v300
    %316 = vmatprep.subr.mxu0 0.0
    %317 = vmatpush1.msra.mxu0 %v301
    %318 = vmatprep.subr.mxu0 0.0
    %319 = vmatpush1.msra.mxu0 %v302
    %320 = vmatprep.subr.mxu0 0.0
    %321 = vmatpush1.msra.mxu0 0.0
    %322 = vmatprep.subr.mxu0 0.0
    %323 = vmatpush1.msra.mxu0 0.0
    %324 = vmatprep.subr.mxu0 0.0
    %325 = vmatpush1.msra.mxu0 0.0
    %326 = vmatprep.subr.mxu0 0.0
    %327 = vmatpush1.msra.mxu0 0.0
    %328 = vmatprep.subr.mxu0 0.0
    %329 = vmatpush1.msra.mxu0 0.0
    %330 = vmatprep.subr.mxu0 0.0
    %331 = vmatpush1.msra.mxu0 0.0
    %332 = vmatprep.subr.mxu0 0.0
    %333 = vmatpush1.msra.mxu0 0.0
    %334 = vmatprep.subr.mxu0 0.0
    %335 = vmatpush1.msra.mxu0 0.0
    %336 = vmatprep.subr.mxu0 0.0
    %337 = vmatpush1.msra.mxu0 0.0
    %338 = vmatprep.subr.mxu0 0.0
    %339 = vmatpush1.msra.mxu0 0.0
    %340 = vmatprep.subr.mxu0 0.0
    %341 = vmatpush1.msra.mxu0 0.0
    %342 = vmatprep.subr.mxu0 0.0
    %343 = vmatpush1.msra.mxu0 0.0
    %344 = vmatprep.subr.mxu0 0.0
    %345 = vmatpush1.msra.mxu0 0.0
    %346 = vmatprep.subr.mxu0 0.0
    %347 = vmatpush1.msra.mxu0 0.0
    %348 = vmatprep.subr.mxu0 0.0
    %349 = vmatpush1.msra.mxu0 0.0
    %350 = vmatprep.subr.mxu0 0.0
    %351 = vmatpush1.msra.mxu0 0.0
    %352 = vmatprep.subr.mxu0 0.0
    %353 = vmatpush1.msra.mxu0 0.0
    %354 = vmatprep.subr.mxu0 0.0
    %355 = vmatpush1.msra.mxu0 0.0
    %356 = vmatprep.subr.mxu0 0.0
    %357 = vmatpush1.msra.mxu0 0.0
    %358 = vmatprep.subr.mxu0 0.0
    %359 = vmatpush1.msra.mxu0 0.0
    %360 = vmatprep.subr.mxu0 0.0
    %361 = vmatpush1.msra.mxu0 0.0
    %362 = vmatprep.subr.mxu0 0.0
    %363 = vmatpush1.msra.mxu0 0.0
    %364 = vmatprep.subr.mxu0 0.0
    %365 = vmatpush1.msra.mxu0 0.0
    %366 = vmatprep.subr.mxu0 0.0
    %367 = vmatpush1.msra.mxu0 0.0
    %368 = vmatprep.subr.mxu0 0.0
    %369 = vmatpush1.msra.mxu0 0.0
    %370 = vmatprep.subr.mxu0 0.0
    %371 = vmatpush1.msra.mxu0 0.0
    %372 = vmatprep.subr.mxu0 0.0
    %373 = vmatpush1.msra.mxu0 0.0
    %374 = vmatprep.subr.mxu0 0.0
    %375 = vmatpush1.msra.mxu0 0.0
    %376 = vmatprep.mubr.f32.mxu0 0.0
    %377 = vmatmul.mubr.f32.gmra.mrb[0].mxu0 %v310
    %v378 = vpop.f32.mrb[0].mxu0
    %v379 = vadd.f32 %v308, %v378
    %v380 = vpop.f32.mrb[0].mxu0
    %381 = vdwg.mxu0
    %vm382 = vcmask 25600
    %383 = vst.msk [vmem:[#allocation8] sm:$0x3] %vm382, %v379
    %v384 = vld [vmem:[%s7] sm:$0x7]
    %v385 = vmul.f32 %v384, 0.5
    %v388 = vunpack.c.l.s4 1966171168
    %v389 = vunpack.c.0.s8 %v388
    %v390 = vlaneseq
    %v391 = vshrl.u32 %v390, 7
    %v392 = vsub.s32 %v389, %v391
    %v393 = vrot.slane %v379, %v392
    %v394 = vcombine.high %v393, %v393
    %v396 = vunpack.c.l.s4 1966171168
    %v397 = vunpack.c.0.s8 %v396
    %v398 = vlaneseq
    %v399 = vshrl.u32 %v398, 7
    %v400 = vsub.s32 %v397, %v399
    %v401 = vrot.slane %v393, %v400
    %v403 = vunpack.c.l.s4 1966171168
    %v404 = vunpack.c.0.s8 %v403
    %v405 = vlaneseq
    %v406 = vshrl.u32 %v405, 7
    %v407 = vsub.s32 %v404, %v406
    %v408 = vrot.slane %v394, %v407
    %v409 = vlaneseq
    %v410 = vshrl.u32 %v409, 7
    %v411 = vsub.s32 0, %v410
    %v412 = vrot.slane %v401, %v411
    %v413 = vlaneseq
    %v414 = vshrl.u32 %v413, 7
    %v415 = vsub.s32 0, %v414
    %v416 = vrot.slane %v408, %v415
    %v419 = vmul.f32 %v385, %v412
    %v420 = vmul.f32 %v385, %v416
    %vm421 = vcmask 26624
    %422 = vst.msk [vmem:[%s10] sm:$0x7] %vm421, %v419
    %423 = vst.msk [vmem:[%s10 + $0x4] sm:$0x7] %vm421, %v420
    // Predicated region
    $region42: #{tpu_custom_call.1} parent=1 // pred_check
      _
    $region43: #{tpu_custom_call.1} parent=1 // pred_check_branch
      %425 = sbr.rel (0) target = $region45
    $region44: #{tpu_custom_call.1} parent=1 // pred_region
      %s427 = ssub.s32 32, 32
      %428 = vsyncadd [#allocation4], %s427
      %s430 = sshll.u32 [#allocation7], 4
      %s431 = int_to_ptr.vmem [resolvable:$true] %s430
      %433 = dma.vmem_to_hbm [thread:$0]  %s431, 32, %s8, [#allocation4]
    $region45: #{tpu_custom_call.1} parent=1 // pred_fallthru
      _
    // Predicated region
    $region46: #{tpu_custom_call.1} parent=1 // pred_check
      _
    $region47: #{tpu_custom_call.1} parent=1 // pred_check_branch
      %435 = sbr.rel (0) target = $region49
    $region48: #{tpu_custom_call.1} parent=1 // pred_region
      %s437 = ssub.s32 32, 32
      %438 = vsyncadd [#allocation9], %s437
      %s440 = sshll.u32 [#allocation8], 4
      %s441 = int_to_ptr.vmem [resolvable:$true] %s440
      %443 = dma.vmem_to_hbm [thread:$0]  %s441, 32, %s9, [#allocation9]
    $region49: #{tpu_custom_call.1} parent=1 // pred_fallthru
      _
    // Predicated region
    $region50: #{tpu_custom_call.1} parent=1 // pred_check
      _
    $region51: #{tpu_custom_call.1} parent=1 // pred_check_branch
      %445 = sbr.rel (0) target = $region53
    $region52: #{tpu_custom_call.1} parent=1 // pred_region
      _
    $region53: #{tpu_custom_call.1} parent=1 // pred_fallthru
      _
    // Predicated region
    $region54: #{tpu_custom_call.1} parent=1 // pred_check
      _
    $region55: #{tpu_custom_call.1} parent=1 // pred_check_branch
      %447 = sbr.rel (0) target = $region57
    $region56: #{tpu_custom_call.1} parent=1 // pred_region
      %448 = dma.done [#allocation4], 32
    $region57: #{tpu_custom_call.1} parent=1 // pred_fallthru
      _
    // Predicated region
    $region58: #{tpu_custom_call.1} parent=1 // pred_check
      _
    $region59: #{tpu_custom_call.1} parent=1 // pred_check_branch
      %450 = sbr.rel (0) target = $region61
    $region60: #{tpu_custom_call.1} parent=1 // pred_region
      %451 = dma.done [#allocation9], 32
    $region61: #{tpu_custom_call.1} parent=1 // pred_fallthru
      _
    // Predicated region
    $region62: #{tpu_custom_call.1} parent=1 // pred_check
      _
    $region63: #{tpu_custom_call.1} parent=1 // pred_check_branch
      %453 = sbr.rel (0) target = $region65
    $region64: #{tpu_custom_call.1} parent=1 // pred_region
      _
    $region65: #{tpu_custom_call.1} parent=1 // pred_fallthru
      _
    %454 = vsyncpa [#allocation3], 1
    %455 = vsyncpa [#allocation6], 1
    %456 = vsyncpa [#allocation4], 1
    %457 = vsyncpa [#allocation9], 1

</llo_original>
